<compile_context>
chip_gen: v6e
topology: v6e:2x2x1
jax: 0.10.0
libtpu: 0.0.40
codegen_flags: <defaults>
</compile_context>

<pallas_src>
import jax
import jax.numpy as jnp
from jax.experimental import pallas as pl
from jax.experimental.pallas import tpu as pltpu


# ---------------------------------------------------------------- kernels ----

def _score_kernel(h_ref, w_ref, b_ref, o_ref):
    # scores = sigmoid(h @ W^T + b) computed as a VPU multiply + lane reduction
    # (an (N,D)@(D,1) MXU matvec would use ~1/128 of the MXU output columns).
    z = jnp.sum(h_ref[...] * w_ref[...], axis=-1, keepdims=True)   # (tm, 1)
    o_ref[...] = jax.nn.sigmoid(z + b_ref[0])


def _gather_scale_kernel(idx_ref, val_ref, h_ref, o_ref):
    # new_h[j, :] = h[idx[j], :] * values[j]; idx and top-k values live in SMEM,
    # all K rows gathered in one grid step (no per-row grid / per-row score DMA).
    K = o_ref.shape[0]
    for j in range(K):                                    # K is small & static
        r = idx_ref[j]                                    # scalar from SMEM
        o_ref[pl.ds(j, 1), :] = h_ref[pl.ds(r, 1), :] * val_ref[j]
    # TODO(synk): for D << 128 the row stores are lane-masked; packing several
    # rows per 128-lane slab (unpacked in the wrapper) would densify stores.


def _pool_adj_kernel(idx_sm_ref, idx_vm_ref, g_ref, o_ref, rows_scr):
    # Fused adjacency path:
    #   rows   = g[idx, :]                      (dynamic sublane gather, idx in SMEM)
    #   m      = bool(rows) @ bool(g)           (bf16 MXU, f32 accumulation; K*N^2)
    #   un     = (m != 0)                       (threshold kept in VMEM)
    #   g_sel  = un @ onehot(idx)               (column selection as K*N*K MXU work,
    #                                            no cross-lane gather)
    #   g_new  = g_sel / degrees                (torch column-broadcast quirk)
    K = o_ref.shape[0]
    N = g_ref.shape[0]

    # 1) gather the K selected rows of g into scratch.
    for j in range(K):                                    # K is small & static
        r = idx_sm_ref[j]                                 # scalar from SMEM
        rows_scr[pl.ds(j, 1), :] = g_ref[pl.ds(r, 1), :]

    # 2) boolean adjacency square restricted to selected rows.
    # bf16 is exact for 0/1 values; accumulate in f32 (exact up to 2^24).
    lhs = (rows_scr[...] != 0.0).astype(jnp.bfloat16)     # (K, N)
    rhs = (g_ref[...] != 0.0).astype(jnp.bfloat16)        # (N, N)
    m = jnp.dot(lhs, rhs, preferred_element_type=jnp.float32)     # (K, N)
    un = (m != 0.0).astype(jnp.bfloat16)                  # threshold in f32, 0/1 in bf16

    # 3) column selection via one-hot MXU matmul (lane gather done on the MXU).
    row_ids = jax.lax.broadcasted_iota(jnp.int32, (N, K), 0)       # (N, K)
    sel = (row_ids == idx_vm_ref[...]).astype(jnp.bfloat16)        # (N, K) one-hot
    g_sel = jnp.dot(un, sel, preferred_element_type=jnp.float32)   # (K, K), exact 0/1

    # 4) norm_g: degrees = sum(g, 1); g = g / degrees.
    # Torch broadcasting divides COLUMN j by degrees[j] — reproduced exactly.
    inv = 1.0 / jnp.sum(g_sel, axis=1)                    # K reciprocals once
    o_ref[...] = g_sel * inv[None, :]
    # TODO(synk): for large N this single-block kernel needs a tiled grid
    # (row-batch gather via manual DMA + pipelined RHS column tiles).


# --------------------------------------------------------------- wrappers ----

def _row_tile(n):
    if n <= 512:
        return n
    for t in (512, 256, 128, 64, 32, 16, 8):
        if n % t == 0:
            return t
    return n


def compute_scores(h, w_row, b):
    """scores = sigmoid(h @ w_row.T + b), returned as (N, 1) float32."""
    N, D = h.shape
    tm = _row_tile(N)
    return pl.pallas_call(
        _score_kernel,
        out_shape=jax.ShapeDtypeStruct((N, 1), jnp.float32),
        grid=(N // tm,),
        in_specs=[
            pl.BlockSpec((tm, D), lambda i: (i, 0)),
            pl.BlockSpec((1, D), lambda i: (0, 0)),
            pl.BlockSpec(memory_space=pltpu.MemorySpace.SMEM),    # bias scalar
        ],
        out_specs=pl.BlockSpec((tm, 1), lambda i: (i, 0)),
        compiler_params=pltpu.CompilerParams(
            dimension_semantics=("parallel",)),                   # megacore on v7x
    )(h, w_row, b)


def gather_and_scale(h, idx, vals, K):
    """new_h = h[idx, :] * vals[:, None] with idx/vals in SMEM, one grid step."""
    N, D = h.shape
    return pl.pallas_call(
        _gather_scale_kernel,
        out_shape=jax.ShapeDtypeStruct((K, D), jnp.float32),
        in_specs=[
            pl.BlockSpec(memory_space=pltpu.MemorySpace.SMEM),    # idx (int32)
            pl.BlockSpec(memory_space=pltpu.MemorySpace.SMEM),    # top-k values (f32)
            pl.BlockSpec(memory_space=pltpu.MemorySpace.VMEM),    # h
        ],
        out_specs=pl.BlockSpec(memory_space=pltpu.MemorySpace.VMEM),
    )(idx, vals, h)


def pooled_adjacency(g, idx, K):
    """g_new = norm_g( ((g_bool[idx,:] @ g_bool) != 0)[:, idx] ), shape (K, K)."""
    N = g.shape[0]
    idx_vm = idx.reshape(1, K)                            # lane vector for one-hot build
    return pl.pallas_call(
        _pool_adj_kernel,
        out_shape=jax.ShapeDtypeStruct((K, K), jnp.float32),
        in_specs=[
            pl.BlockSpec(memory_space=pltpu.MemorySpace.SMEM),    # idx (scalar reads)
            pl.BlockSpec(memory_space=pltpu.MemorySpace.VMEM),    # idx as (1, K) vector
            pl.BlockSpec(memory_space=pltpu.MemorySpace.VMEM),    # g
        ],
        out_specs=pl.BlockSpec(memory_space=pltpu.MemorySpace.VMEM),
        scratch_shapes=[pltpu.VMEM((K, N), jnp.float32)],
        compiler_params=pltpu.CompilerParams(
            vmem_limit_bytes=32 * 1024 * 1024),                   # safe on v5e/v6e/v7x
    )(idx, idx_vm, g)


def pool_forward(g, h, w_row, b, k_ratio):
    """Mirrors Pool.forward + top_k_graph.  Returns (g_new, new_h, idx)."""
    N = g.shape[0]
    K = max(2, int(k_ratio * N))

    # Z = drop(h)  -- p = 0 => Identity.
    # TODO(synk): stochastic nn.Dropout (p > 0, training mode) not implemented.
    scores = compute_scores(h, w_row, b).reshape(N)       # sigmoid(proj(h)).squeeze()

    # TODO(synk): top-k selection has no clean Pallas equivalent; done with lax.top_k.
    vals, idx = jax.lax.top_k(scores, K)
    idx = idx.astype(jnp.int32)

    # new_h = h[idx, :] * values[:, None]
    new_h = gather_and_scale(h, idx, vals, K)

    # un_g = bool(bool(g) @ bool(g)); un_g = un_g[idx][:, idx]; g = norm_g(un_g)
    g_new = pooled_adjacency(g, idx, K)                   # fully fused in one kernel

    return g_new, new_h, idx


# ------------------------------------------------------------------- main ----

if __name__ == "__main__":
    key = jax.random.PRNGKey(0)
    kg, kh, kw = jax.random.split(key, 3)

    N, D = 16, 32          # num_nodes, in_dim
    k_ratio = 0.5          # Pool(k=0.5, in_dim=32, p=0.0)

    # Deterministic inputs: binary adjacency with self-loops, gaussian features.
    g_rand = (jax.random.uniform(kg, (N, N)) < 0.3).astype(jnp.float32)
    g = jnp.maximum(g_rand, jnp.eye(N, dtype=jnp.float32))
    h = jax.random.normal(kh, (N, D), dtype=jnp.float32)

    # Deterministic parameters for nn.Linear(in_dim, 1): weight (1, D), bias (1,).
    proj_w = jax.random.normal(kw, (1, D), dtype=jnp.float32) / jnp.sqrt(D)
    proj_b = jnp.full((1,), 0.1, dtype=jnp.float32)

    g_out, new_h, idx = pool_forward(g, h, proj_w, proj_b, k_ratio)
    jax.block_until_ready((g_out, new_h, idx))

    # Pure-JAX reference for correctness of the Pallas kernels.
    K = max(2, int(k_ratio * N))
    scores_ref = jax.nn.sigmoid(h @ proj_w.T + proj_b[0]).reshape(N)
    vals_ref, idx_ref = jax.lax.top_k(scores_ref, K)
    new_h_ref = h[idx_ref] * vals_ref[:, None]
    ug = (g != 0).astype(jnp.float32)
    ug2 = ((ug @ ug) != 0).astype(jnp.float32)
    gs = ug2[idx_ref][:, idx_ref]
    g_ref_out = gs / jnp.sum(gs, axis=1)[None, :]

    assert jnp.array_equal(idx, idx_ref.astype(jnp.int32)), "idx mismatch"
    assert jnp.allclose(new_h, new_h_ref, atol=1e-5, rtol=1e-5), "new_h mismatch"
    assert jnp.allclose(g_out, g_ref_out, atol=1e-5, rtol=1e-5), "g mismatch"

    print("KERNEL_OK")
</pallas_src>

<mosaic_0001>
module attributes {stable_mosaic.version = 11 : i64} {
  func.func @_score_kernel(%arg0: i32, %arg1: memref<16x32xf32, #tpu.memory_space<vmem>>, %arg2: memref<1x32xf32, #tpu.memory_space<vmem>>, %arg3: memref<1xf32, #tpu.memory_space<smem>>, %arg4: memref<16x1xf32, #tpu.memory_space<vmem>>) attributes {dimension_semantics = [#tpu.dimension_semantics<parallel>], iteration_bounds = array<i64: 1>, scalar_prefetch = 0 : i64, scratch_operands = 0 : i64, tpu.core_type = #tpu.core_type<tc>, window_params = [{transform_indices = @transform_0, window_bounds = array<i64: 16, 32>}, {pipeline_mode = #tpu.pipeline_mode<synchronous>, transform_indices = @transform_1, window_bounds = array<i64: 1, 32>}, {transform_indices = @transform_2, window_bounds = array<i64: 1>}, {transform_indices = @transform_3, window_bounds = array<i64: 16, 1>}]} {
    %c0 = arith.constant 0 : index
    %c0_0 = arith.constant 0 : index
    %0 = vector.load %arg1[%c0, %c0_0] : memref<16x32xf32, #tpu.memory_space<vmem>>, vector<16x32xf32>
    %c0_1 = arith.constant 0 : index
    %c0_2 = arith.constant 0 : index
    %1 = vector.load %arg2[%c0_1, %c0_2] : memref<1x32xf32, #tpu.memory_space<vmem>>, vector<1x32xf32>
    %2 = vector.broadcast %1 : vector<1x32xf32> to vector<16x32xf32>
    %3 = arith.mulf %0, %2 : vector<16x32xf32>
    %cst = arith.constant dense<0.000000e+00> : vector<16xf32>
    %4 = vector.multi_reduction <add>, %3, %cst [1] : vector<16x32xf32> to vector<16xf32>
    %5 = vector.shape_cast %4 : vector<16xf32> to vector<16x1xf32>
    %c0_3 = arith.constant 0 : index
    %6 = memref.load %arg3[%c0_3] : memref<1xf32, #tpu.memory_space<smem>>
    %7 = vector.broadcast %6 : f32 to vector<16x1xf32>
    %8 = arith.addf %5, %7 : vector<16x1xf32>
    %9 = arith.negf %8 : vector<16x1xf32>
    %10 = math.exp %9 : vector<16x1xf32>
    %cst_4 = arith.constant 1.000000e+00 : f32
    %11 = vector.broadcast %cst_4 : f32 to vector<16x1xf32>
    %12 = arith.addf %11, %10 : vector<16x1xf32>
    %13 = arith.divf %11, %12 : vector<16x1xf32>
    %c0_5 = arith.constant 0 : index
    %c0_6 = arith.constant 0 : index
    %14 = vector.load %arg4[%c0_5, %c0_6] : memref<16x1xf32, #tpu.memory_space<vmem>>, vector<16x1xf32>
    tpu.vector_store %arg4[%c0_5, %c0_6], %13 {strides = array<i32>} : memref<16x1xf32, #tpu.memory_space<vmem>>, vector<16x1xf32>,
    return
  }
  func.func @transform_0(%arg0: i32) -> (i32, i32) {
    %c0_i32 = arith.constant 0 : i32
    %c0_i32_0 = arith.constant 0 : i32
    return %arg0, %c0_i32 : i32, i32
  }
  func.func @transform_1(%arg0: i32) -> (i32, i32) {
    %c0_i32 = arith.constant 0 : i32
    %c0_i32_0 = arith.constant 0 : i32
    %c0_i32_1 = arith.constant 0 : i32
    return %c0_i32, %c0_i32_0 : i32, i32
  }
  func.func @transform_2(%arg0: i32) -> i32 {
    %c0_i32 = arith.constant 0 : i32
    %c0_i32_0 = arith.constant 0 : i32
    return %c0_i32 : i32
  }
  func.func @transform_3(%arg0: i32) -> (i32, i32) {
    %c0_i32 = arith.constant 0 : i32
    %c0_i32_0 = arith.constant 0 : i32
    return %arg0, %c0_i32 : i32, i32
  }
}

</mosaic_0001>

<llo_original>
// kernel: tpu_custom_call.1
$region0: #{tpu_custom_call.1}
  #allocation0 [shape = 'u32[]', space=smem, size = 0x4, offset = 0x4, fixed_abs, tag = 'smem constant byte address 0x4 - core index']
  #allocation1 [shape = 'u32[144,128]{1,0:T(1,128)}', space=vmem, size = 0x12000, scoped, tag = 'internal scratch']
  #allocation2 [shape = 'f32[1]{0:T(128)S(6)}', space=smem, size = 0x200, scoped, tag = 'scoped memory for tpu_custom_call.1']
  %s0 = inlined_call_operand.hbm [shape: f32[16,32], index: 0, kind: input, shape index: {}]
  %s1 = inlined_call_operand.vmem [shape: f32[1,32], index: 1, kind: input, shape index: {}]
  %s2 = inlined_call_operand.<no memory space> [shape: f32[1], index: 2, kind: input, shape index: {}]
  %s3 = inlined_call_operand.vmem [shape: f32[16,1], index: 3, kind: output, shape index: {}]
  %s4 = sld [smem:[#allocation0]]
  $region26: #{tpu_custom_call.1} parent=0
    _
  %s6 = ssub.s32 1, %s4
  %s7 = scalar_select 0, %s6, %s4
  %8 = sst [smem:[#allocation2]] %s2
  $region1: #{tpu_custom_call.1} parent=0
    #allocation3 [shape = 'u8[8192]{0}', space=vmem, size = 0x2000, scoped, tag = 'input window, operand 0, single buffered']
    #allocation4 [shape = 's32[1]{0}', space=sflag, size = 0x4, scoped, tag = 'scoped memory for tpu_custom_call.1']
    %9 = vsyncpa [#allocation4], 0
    // Predicated region
    $region2: #{tpu_custom_call.1} parent=1 // pred_check
      _
    $region3: #{tpu_custom_call.1} parent=1 // pred_check_branch
      %11 = sbr.rel (0) target = $region5
    $region4: #{tpu_custom_call.1} parent=1 // pred_region
      %s13 = ssub.s32 256, 256
      %14 = vsyncadd [#allocation4], %s13
      %s15 = sshll.u32 [#allocation3], 4
      %s16 = int_to_ptr.vmem [resolvable:$true] %s15
      %21 = dma.hbm_to_vmem [thread:$0]  %s0, 256, %s16, [#allocation4], 128, 128, 8
    $region5: #{tpu_custom_call.1} parent=1 // pred_fallthru
      _
    // Predicated region
    $region6: #{tpu_custom_call.1} parent=1 // pred_check
      _
    $region7: #{tpu_custom_call.1} parent=1 // pred_check_branch
      %23 = sbr.rel (0) target = $region9
    $region8: #{tpu_custom_call.1} parent=1 // pred_region
      _
    $region9: #{tpu_custom_call.1} parent=1 // pred_fallthru
      _
    // Predicated region
    $region10: #{tpu_custom_call.1} parent=1 // pred_check
      _
    $region11: #{tpu_custom_call.1} parent=1 // pred_check_branch
      %25 = sbr.rel (0) target = $region13
    $region12: #{tpu_custom_call.1} parent=1 // pred_region
      _
    $region13: #{tpu_custom_call.1} parent=1 // pred_fallthru
      _
    // Predicated region
    $region14: #{tpu_custom_call.1} parent=1 // pred_check
      _
    $region15: #{tpu_custom_call.1} parent=1 // pred_check_branch
      %27 = sbr.rel (0) target = $region17
    $region16: #{tpu_custom_call.1} parent=1 // pred_region
      %28 = dma.done [#allocation4], 256
    $region17: #{tpu_custom_call.1} parent=1 // pred_fallthru
      _
    %v29 = vld [vmem:[#allocation3] sm:$0xff]
    %v30 = vld [vmem:[#allocation3 + $0x8] sm:$0xff]
    %v31 = vld [vmem:[%s1] sm:$0x1]
    %v33 = vlaneseq
    %v34 = vshrl.u32 %v33, 7
    %v35 = vsub.s32 0, %v34
    %v36 = vrot.slane %v31, %v35
    %v38 = vmul.f32 %v29, %v36
    %v39 = vmul.f32 %v30, %v36
    %vm40 = vcmask 261120
    %v41 = vsel %vm40, %v38, 0.0
    %42 = vadd.xlane.f32.xlu0 %v41
    %v43 = vpop.xlane.xlu0 %42
    %v44 = vsel %vm40, %v39, 0.0
    %45 = vadd.xlane.f32.xlu0 %v44
    %v46 = vpop.xlane.xlu0 %45
    %s47 = sld [smem:[#allocation2]]
    %v48 = vstv %s47
    %v49 = vadd.f32 %v43, %v48
    %v50 = vadd.f32 %v46, %v48
    %v51 = vxor.u32 %v49, 2147483648
    %v52 = vxor.u32 %v50, 2147483648
    %v53 = vmul.f32 %v51, 1.442695
    %v54 = vpow.pop %v53
    %v55 = vmul.f32 %v52, 1.442695
    %v56 = vpow.pop %v55
    %v57 = vadd.f32 %v54, 1.0
    %v58 = vadd.f32 %v56, 1.0
    %v59 = vrcp.pop %v57
    %v60 = vmul.f32 1.0, %v59
    %v61 = vrcp.pop %v58
    %v62 = vmul.f32 1.0, %v61
    %vm63 = vcmask 7168
    %64 = vst.msk [vmem:[%s3] sm:$0xff] %vm63, %v60
    %65 = vst.msk [vmem:[%s3 + $0x8] sm:$0xff] %vm63, %v62
    // Predicated region
    $region18: #{tpu_custom_call.1} parent=1 // pred_check
      _
    $region19: #{tpu_custom_call.1} parent=1 // pred_check_branch
      %67 = sbr.rel (0) target = $region21
    $region20: #{tpu_custom_call.1} parent=1 // pred_region
      _
    $region21: #{tpu_custom_call.1} parent=1 // pred_fallthru
      _
    // Predicated region
    $region22: #{tpu_custom_call.1} parent=1 // pred_check
      _
    $region23: #{tpu_custom_call.1} parent=1 // pred_check_branch
      %69 = sbr.rel (0) target = $region25
    $region24: #{tpu_custom_call.1} parent=1 // pred_region
      _
    $region25: #{tpu_custom_call.1} parent=1 // pred_fallthru
      _
    %70 = vsyncpa [#allocation4], 1

</llo_original>
